<compile_context>
chip_gen: v5e
topology: v5e:2x2
jax: 0.10.0
libtpu: 0.0.40
codegen_flags: <defaults>
</compile_context>

<pallas_src>
import jax
import jax.numpy as jnp
from jax.experimental import pallas as pl
from jax.experimental.pallas import tpu as pltpu

HIDDEN = 32
PACK = 4                      # rows packed per 128-lane vector row
WIDE = PACK * HIDDEN          # 128


def fused_linear_sub_kernel(x_ref, w_ref, c_ref, o_ref):
    # (tile_rows, W) @ (W, W) on the MXU with f32 accumulation, then one
    # broadcast VPU add of the pre-folded (bias - other) constant.
    acc = jnp.dot(x_ref[...], w_ref[...], preferred_element_type=jnp.float32)
    o_ref[...] = (acc + c_ref[...]).astype(o_ref.dtype)


def pack_params(weight, bias, other):
    """One-time parameter prep; cache this across forward calls (re-run only
    when the weights change)."""
    wt = weight.T.astype(jnp.float32)                                  # (in, out)
    c = (bias.reshape(1, HIDDEN) - other.reshape(1, HIDDEN)).astype(jnp.float32)
    w_blk = jnp.kron(jnp.eye(PACK, dtype=jnp.float32), wt)             # (128, 128) block-diag
    c_wide = jnp.tile(c, (1, PACK))                                    # (1, 128)
    return {"wt": wt, "c": c, "w_blk": w_blk, "c_wide": c_wide}


def _pick_tile_rows(rows, cap):
    """Fixed 8-aligned tile; grid = cdiv(rows, tile). Also tries to get
    grid >= 2 so both v7x TensorCores participate (parallel axis)."""
    if rows <= 8:
        return rows                      # full-extent block — always legal
    half = (rows + 1) // 2               # aim for at least 2 grid steps
    tile = min(cap, half)
    tile = max(8, (tile // 8) * 8)       # multiple of 8 (sublane aligned)
    return tile


def _linear_sub_call(x2d, w, c_row, *, tile_rows_cap=2048):
    """out = x2d @ w + c_row, tiled over rows.  x2d: (rows, W); w: (W, W); c_row: (1, W)."""
    rows, W = x2d.shape
    tile_rows = _pick_tile_rows(rows, tile_rows_cap)
    grid_steps = pl.cdiv(rows, tile_rows)

    # Deeper buffering only pays off when per-tile compute is ~zero and the
    # grid is long (tile size constrained); otherwise default double-buffer.
    deep = grid_steps >= 4
    if deep:
        x_spec = pl.BlockSpec((tile_rows, W), lambda i: (i, 0),
                              pipeline_mode=pl.Buffered(3))
        o_spec = pl.BlockSpec((tile_rows, W), lambda i: (i, 0),
                              pipeline_mode=pl.Buffered(3))
        nbuf = 3
    else:
        x_spec = pl.BlockSpec((tile_rows, W), lambda i: (i, 0))
        o_spec = pl.BlockSpec((tile_rows, W), lambda i: (i, 0))
        nbuf = 2

    # Explicit scoped-VMEM budget: nbuf buffers each for x and out, resident
    # weight + constant, plus headroom.  Stays well under v5e's 16 MiB default
    # at the 2048-row cap, and always <= 48 MiB (fits v7x's 64 MiB VMEM).
    block_bytes = tile_rows * W * 4
    vmem_limit = block_bytes * nbuf * 2 + (W * W + W) * 4 * 2 + (4 << 20)
    vmem_limit = int(min(max(vmem_limit, 16 << 20), 48 << 20))

    cost = pl.CostEstimate(
        flops=2 * rows * W * W + rows * W,
        transcendentals=0,
        bytes_accessed=2 * rows * W * 4 + (W * W + W) * 4,
    )

    return pl.pallas_call(
        fused_linear_sub_kernel,
        out_shape=jax.ShapeDtypeStruct((rows, W), jnp.float32),
        grid_spec=pltpu.PrefetchScalarGridSpec(
            num_scalar_prefetch=0,
            grid=(grid_steps,),
            in_specs=[
                x_spec,                                        # x tile (lane-dense)
                pl.BlockSpec((W, W), lambda i: (0, 0)),        # weight (resident)
                pl.BlockSpec((1, W), lambda i: (0, 0)),        # bias - other (resident)
            ],
            out_specs=o_spec,
        ),
        compiler_params=pltpu.CompilerParams(
            dimension_semantics=("parallel",),                 # shard batch tiles across TCs
            vmem_limit_bytes=vmem_limit,
        ),
        cost_estimate=cost,
    )(x2d, w, c_row)


def model_forward(x1, params, *, tile_rows_cap=2048):
    """x1: (B, 32).  Returns v2 = x1 @ W^T + b - other  (clamp is dead code)."""
    B, D = x1.shape
    assert D == HIDDEN
    if B % PACK == 0:
        # Lane-dense path: view (B, 32) as (B//4, 128) — same row-major bytes,
        # no HBM pad/slice copies — and use the 128x128 block-diagonal weight.
        rows = B // PACK
        x_wide = x1.reshape(rows, WIDE)
        out_wide = _linear_sub_call(x_wide, params["w_blk"], params["c_wide"],
                                    tile_rows_cap=tile_rows_cap)
        return out_wide.reshape(B, HIDDEN)
    # Ragged batch (rare): run directly on (B, 32) — avoids the extra HBM
    # read/write passes that jnp.pad + out[:B] would cost a mem-bound kernel.
    return _linear_sub_call(x1, params["wt"], params["c"],
                            tile_rows_cap=tile_rows_cap)


if __name__ == "__main__":
    key = jax.random.PRNGKey(0)
    k_x, k_w, k_b, k_o = jax.random.split(key, 4)

    weight = jax.random.normal(k_w, (HIDDEN, HIDDEN), dtype=jnp.float32) * 0.1
    bias = jax.random.normal(k_b, (HIDDEN,), dtype=jnp.float32) * 0.1
    other = jax.random.normal(k_o, (1, HIDDEN), dtype=jnp.float32)

    # One-time prep, cached across forward calls.
    params = pack_params(weight, bias, other)

    def ref_fn(x):
        return (x @ weight.T + bias) - other

    # Main small case: B multiple of PACK -> lane-dense 128-wide path, grid=1.
    B = 8
    x1 = jax.random.normal(k_x, (B, HIDDEN), dtype=jnp.float32)
    out = jax.block_until_ready(model_forward(x1, params))
    assert out.shape == (B, HIDDEN)
    assert jnp.allclose(out, ref_fn(x1), atol=1e-5, rtol=1e-5)

    # Ragged batch: exercises the no-pad (B, 32) fallback path.
    x2 = jax.random.normal(k_x, (6, HIDDEN), dtype=jnp.float32)
    out2 = jax.block_until_ready(model_forward(x2, params))
    assert jnp.allclose(out2, ref_fn(x2), atol=1e-5, rtol=1e-5)

    # Multi-tile cdiv grid with a partial last block (rows=18 -> tile 8, grid 3).
    x3 = jax.random.normal(k_x, (72, HIDDEN), dtype=jnp.float32)
    out3 = jax.block_until_ready(model_forward(x3, params))
    assert jnp.allclose(out3, ref_fn(x3), atol=1e-5, rtol=1e-5)

    print("KERNEL_OK")
</pallas_src>

<mosaic_0001>
module attributes {stable_mosaic.version = 11 : i64} {
  func.func @fused_linear_sub_kernel(%arg0: i32, %arg1: memref<2x128xf32, #tpu.memory_space<vmem>>, %arg2: memref<128x128xf32, #tpu.memory_space<vmem>>, %arg3: memref<1x128xf32, #tpu.memory_space<vmem>>, %arg4: memref<2x128xf32, #tpu.memory_space<vmem>>) attributes {dimension_semantics = [#tpu.dimension_semantics<parallel>], iteration_bounds = array<i64: 1>, scalar_prefetch = 0 : i64, scratch_operands = 0 : i64, tpu.core_type = #tpu.core_type<tc>, window_params = [{transform_indices = @transform_0, window_bounds = array<i64: 2, 128>}, {pipeline_mode = #tpu.pipeline_mode<synchronous>, transform_indices = @transform_1, window_bounds = array<i64: 128, 128>}, {pipeline_mode = #tpu.pipeline_mode<synchronous>, transform_indices = @transform_2, window_bounds = array<i64: 1, 128>}, {transform_indices = @transform_3, window_bounds = array<i64: 2, 128>}]} {
    %c0 = arith.constant 0 : index
    %c0_0 = arith.constant 0 : index
    %0 = vector.load %arg1[%c0, %c0_0] : memref<2x128xf32, #tpu.memory_space<vmem>>, vector<2x128xf32>
    %c0_1 = arith.constant 0 : index
    %c0_2 = arith.constant 0 : index
    %1 = vector.load %arg2[%c0_1, %c0_2] : memref<128x128xf32, #tpu.memory_space<vmem>>, vector<128x128xf32>
    %cst = arith.constant dense<0.000000e+00> : vector<2x128xf32>
    %2 = tpu.matmul %0, %1, %cst {dimension_numbers = #tpu.dot_dimension_numbers<[1], [0], [0], [1], [0, 0, 1, 1], [], []>} : vector<2x128xf32>, vector<128x128xf32>, vector<2x128xf32> -> vector<2x128xf32>
    %c0_3 = arith.constant 0 : index
    %c0_4 = arith.constant 0 : index
    %3 = vector.load %arg3[%c0_3, %c0_4] : memref<1x128xf32, #tpu.memory_space<vmem>>, vector<1x128xf32>
    %4 = vector.broadcast %3 : vector<1x128xf32> to vector<2x128xf32>
    %5 = arith.addf %2, %4 : vector<2x128xf32>
    %c0_5 = arith.constant 0 : index
    %c0_6 = arith.constant 0 : index
    %6 = vector.load %arg4[%c0_5, %c0_6] : memref<2x128xf32, #tpu.memory_space<vmem>>, vector<2x128xf32>
    tpu.vector_store %arg4[%c0_5, %c0_6], %5 {strides = array<i32>} : memref<2x128xf32, #tpu.memory_space<vmem>>, vector<2x128xf32>,
    return
  }
  func.func @transform_0(%arg0: i32) -> (i32, i32) {
    %c0_i32 = arith.constant 0 : i32
    %c0_i32_0 = arith.constant 0 : i32
    return %arg0, %c0_i32 : i32, i32
  }
  func.func @transform_1(%arg0: i32) -> (i32, i32) {
    %c0_i32 = arith.constant 0 : i32
    %c0_i32_0 = arith.constant 0 : i32
    %c0_i32_1 = arith.constant 0 : i32
    return %c0_i32, %c0_i32_0 : i32, i32
  }
  func.func @transform_2(%arg0: i32) -> (i32, i32) {
    %c0_i32 = arith.constant 0 : i32
    %c0_i32_0 = arith.constant 0 : i32
    %c0_i32_1 = arith.constant 0 : i32
    return %c0_i32, %c0_i32_0 : i32, i32
  }
  func.func @transform_3(%arg0: i32) -> (i32, i32) {
    %c0_i32 = arith.constant 0 : i32
    %c0_i32_0 = arith.constant 0 : i32
    return %arg0, %c0_i32 : i32, i32
  }
}

</mosaic_0001>

<llo_original>
// kernel: tpu_custom_call.1
$region0: #{tpu_custom_call.1}
  #allocation0 [shape = 'u32[]', space=smem, size = 0x4, offset = 0x4, fixed_abs, tag = 'smem constant byte address 0x4 - core index']
  #allocation1 [shape = 'u32[72,128]{1,0:T(1,128)}', space=vmem, size = 0x9000, scoped, tag = 'internal scratch']
  %s0 = inlined_call_operand.hbm [shape: f32[2,128], index: 0, kind: input, shape index: {}]
  %s1 = inlined_call_operand.hbm [shape: f32[128,128], index: 1, kind: input, shape index: {}]
  %s2 = inlined_call_operand.vmem [shape: f32[1,128], index: 2, kind: input, shape index: {}]
  %s3 = inlined_call_operand.hbm [shape: f32[2,128], index: 3, kind: output, shape index: {}]
  %s4 = sld [smem:[#allocation0]]
  $region30: #{tpu_custom_call.1} parent=0
    _
  %s6 = ssub.s32 1, %s4
  %s7 = scalar_select 0, %s6, %s4
  $region1: #{tpu_custom_call.1} parent=0
    #allocation2 [shape = 'u8[1024]{0}', space=vmem, size = 0x400, scoped, tag = 'input window, operand 0, single buffered']
    #allocation3 [shape = 's32[1]{0}', space=sflag, size = 0x4, scoped, tag = 'scoped memory for tpu_custom_call.1']
    #allocation4 [shape = 's32[1]{0}', space=sflag, size = 0x4, scoped, tag = 'scoped memory for tpu_custom_call.1']
    #allocation5 [shape = 'u8[65536]{0}', space=vmem, size = 0x10000, scoped, tag = 'input window, operand 1, single buffered']
    #allocation6 [shape = 's32[1]{0}', space=sflag, size = 0x4, scoped, tag = 'scoped memory for tpu_custom_call.1']
    #allocation7 [shape = 'u8[1024]{0}', space=vmem, size = 0x400, scoped, tag = 'output window, operand 0, single buffered']
    %8 = vsyncpa [#allocation3], 0
    %9 = vsyncpa [#allocation6], 0
    %10 = vsyncpa [#allocation4], 0
    // Predicated region
    $region2: #{tpu_custom_call.1} parent=1 // pred_check
      _
    $region3: #{tpu_custom_call.1} parent=1 // pred_check_branch
      %12 = sbr.rel (0) target = $region5
    $region4: #{tpu_custom_call.1} parent=1 // pred_region
      %14 = vsyncadd [#allocation3], 0
      %s16 = sshll.u32 %s0, 4
      %s17 = int_to_ptr.hbm [resolvable:$true] %s16
      %s18 = sshll.u32 [#allocation2], 4
      %s19 = int_to_ptr.vmem [resolvable:$true] %s18
      %21 = dma.hbm_to_vmem [thread:$0]  %s17, 32, %s19, [#allocation3]
    $region5: #{tpu_custom_call.1} parent=1 // pred_fallthru
      _
    // Predicated region
    $region6: #{tpu_custom_call.1} parent=1 // pred_check
      _
    $region7: #{tpu_custom_call.1} parent=1 // pred_check_branch
      %23 = sbr.rel (0) target = $region9
    $region8: #{tpu_custom_call.1} parent=1 // pred_region
      %25 = vsyncadd [#allocation6], 0
      %s26 = sshll.u32 %s1, 4
      %s27 = int_to_ptr.hbm [resolvable:$true] %s26
      %s28 = sshll.u32 [#allocation5], 4
      %s29 = int_to_ptr.vmem [resolvable:$true] %s28
      %34 = dma.hbm_to_vmem [thread:$0]  %s27, 2048, %s29, [#allocation6], 128, 128, 8
    $region9: #{tpu_custom_call.1} parent=1 // pred_fallthru
      _
    // Predicated region
    $region10: #{tpu_custom_call.1} parent=1 // pred_check
      _
    $region11: #{tpu_custom_call.1} parent=1 // pred_check_branch
      %36 = sbr.rel (0) target = $region13
    $region12: #{tpu_custom_call.1} parent=1 // pred_region
      _
    $region13: #{tpu_custom_call.1} parent=1 // pred_fallthru
      _
    // Predicated region
    $region14: #{tpu_custom_call.1} parent=1 // pred_check
      _
    $region15: #{tpu_custom_call.1} parent=1 // pred_check_branch
      %38 = sbr.rel (0) target = $region17
    $region16: #{tpu_custom_call.1} parent=1 // pred_region
      %40 = dma.done [#allocation3], 32
    $region17: #{tpu_custom_call.1} parent=1 // pred_fallthru
      _
    // Predicated region
    $region18: #{tpu_custom_call.1} parent=1 // pred_check
      _
    $region19: #{tpu_custom_call.1} parent=1 // pred_check_branch
      %42 = sbr.rel (0) target = $region21
    $region20: #{tpu_custom_call.1} parent=1 // pred_region
      %44 = dma.done [#allocation6], 2048
    $region21: #{tpu_custom_call.1} parent=1 // pred_fallthru
      _
    %v45 = vld [vmem:[#allocation2] sm:$0x3]
    %v46 = vld [vmem:[#allocation5] sm:$0xff]
    %v47 = vld [vmem:[#allocation5 + $0x8] sm:$0xff]
    %v48 = vld [vmem:[#allocation5 + $0x10] sm:$0xff]
    %v49 = vld [vmem:[#allocation5 + $0x18] sm:$0xff]
    %v50 = vld [vmem:[#allocation5 + $0x20] sm:$0xff]
    %v51 = vld [vmem:[#allocation5 + $0x28] sm:$0xff]
    %v52 = vld [vmem:[#allocation5 + $0x30] sm:$0xff]
    %v53 = vld [vmem:[#allocation5 + $0x38] sm:$0xff]
    %v54 = vld [vmem:[#allocation5 + $0x40] sm:$0xff]
    %v55 = vld [vmem:[#allocation5 + $0x48] sm:$0xff]
    %v56 = vld [vmem:[#allocation5 + $0x50] sm:$0xff]
    %v57 = vld [vmem:[#allocation5 + $0x58] sm:$0xff]
    %v58 = vld [vmem:[#allocation5 + $0x60] sm:$0xff]
    %v59 = vld [vmem:[#allocation5 + $0x68] sm:$0xff]
    %v60 = vld [vmem:[#allocation5 + $0x70] sm:$0xff]
    %v61 = vld [vmem:[#allocation5 + $0x78] sm:$0xff]
    %v62 = vld [vmem:[%s2] sm:$0x1]
    %v64 = vperm.slane %v62, 0
    %66 = vmatpush.msra.mxu0 %v61
    %67 = vmatpush.msra.mxu0 %v60
    %68 = vmatpush.msra.mxu0 %v59
    %69 = vmatpush.msra.mxu0 %v58
    %70 = vmatpush.msra.mxu0 %v57
    %71 = vmatpush.msra.mxu0 %v56
    %72 = vmatpush.msra.mxu0 %v55
    %73 = vmatpush.msra.mxu0 %v54
    %74 = vmatpush.msra.mxu0 %v53
    %75 = vmatpush.msra.mxu0 %v52
    %76 = vmatpush.msra.mxu0 %v51
    %77 = vmatpush.msra.mxu0 %v50
    %78 = vmatpush.msra.mxu0 %v49
    %79 = vmatpush.msra.mxu0 %v48
    %80 = vmatpush.msra.mxu0 %v47
    %81 = vmatpush.msra.mxu0 %v46
    %82 = vmatmul.f32.gmra.mxu0 %v45
    %v83 = vpop.f32.mrf.mxu0
    %v84 = vadd.f32 %v64, %v83
    %85 = vdwg.mxu0
    %86 = vst [vmem:[#allocation7] sm:$0x3] %v84
    // Predicated region
    $region22: #{tpu_custom_call.1} parent=1 // pred_check
      _
    $region23: #{tpu_custom_call.1} parent=1 // pred_check_branch
      %88 = sbr.rel (0) target = $region25
    $region24: #{tpu_custom_call.1} parent=1 // pred_region
      %90 = vsyncadd [#allocation4], 0
      %s92 = sshll.u32 [#allocation7], 4
      %s93 = int_to_ptr.vmem [resolvable:$true] %s92
      %s94 = sshll.u32 %s3, 4
      %s95 = int_to_ptr.hbm [resolvable:$true] %s94
      %97 = dma.vmem_to_hbm [thread:$0]  %s93, 32, %s95, [#allocation4]
    $region25: #{tpu_custom_call.1} parent=1 // pred_fallthru
      _
    // Predicated region
    $region26: #{tpu_custom_call.1} parent=1 // pred_check
      _
    $region27: #{tpu_custom_call.1} parent=1 // pred_check_branch
      %99 = sbr.rel (0) target = $region29
    $region28: #{tpu_custom_call.1} parent=1 // pred_region
      %101 = dma.done [#allocation4], 32
    $region29: #{tpu_custom_call.1} parent=1 // pred_fallthru
      _
    %102 = vsyncpa [#allocation3], 1
    %103 = vsyncpa [#allocation6], 1
    %104 = vsyncpa [#allocation4], 1

</llo_original>
